<compile_context>
chip_gen: v6e
topology: v6e:2x2x1
jax: 0.10.0
libtpu: 0.0.40
codegen_flags: <defaults>
</compile_context>

<pallas_src>
import jax
import jax.numpy as jnp
from jax.experimental import pallas as pl
from jax.experimental.pallas import tpu as pltpu

# ---- model hyper-parameters (small, consistent with the module) ----
BATCH = 2
SEQ = 16          # sequence length L
EMBED = 8         # embed_dim
FILTERS = 16      # filters=(16,)
KSIZE = 4         # kernel_sizes=(4,)
DENSE = 32        # dense_sizes=(32,)
NUM_CLASSES = 5

L_OUT = SEQ - KSIZE + 1          # 13 ('valid' conv output length)
L_PAD = 16                       # pad l_out groups to a power of two
X_LANES = SEQ * EMBED            # 128: one example = one full lane row
CONV_LANES = L_PAD * FILTERS     # 256: banded-conv output lanes
OUT_PAD = 128                    # lane-dense logits block

# rows of the packed small-parameter buffer (one (8, 256) f32 tile, one DMA)
_ROW_CONV_SHIFT = 0              # conv bias*scale + BN shift, per (l_out, f)
_ROW_FC0_SHIFT = 1               # fc0 bias*scale + BN shift, per dense unit
_ROW_BLAST = 2                   # fc_last bias, padded to 128 lanes
SMALL_ROWS = 8


def cnn_text_kernel(x_ref, wband_ref, w1_ref, w2_ref, small_ref, out_ref):
    """Fused Conv1d+BN+ReLU+GlobalMaxPool -> Linear+BN+ReLU -> Linear."""
    small = small_ref[...]                                    # (8, 256) f32

    # --- Conv1d + folded BN: one lane-dense banded matmul on the MXU ---
    conv = jnp.dot(x_ref[...], wband_ref[...],
                   preferred_element_type=jnp.float32)        # (bb, 256) f32
    y = jnp.maximum(conv + small[_ROW_CONV_SHIFT:_ROW_CONV_SHIFT + 1, :], 0.0)
    # Padded l_out groups (l_out >= L_OUT) have zero weights and zero shift,
    # so they are exactly 0 after ReLU and cannot perturb the max below.

    # --- GlobalMaxPooling over the L_PAD=16 groups of FILTERS lanes ---
    # log2 tree of XLU lane-rolls + VPU max (no relayout, no concat padding).
    t = y
    group = L_PAD // 2
    while group >= 1:
        t = jnp.maximum(
            t, pltpu.roll(t, shift=CONV_LANES - group * FILTERS, axis=1))
        group //= 2
    pooled = t[:, :FILTERS]                                   # (bb, F) f32
    # TODO(synk): nn.Dropout(pooling_dropout) is identity in eval mode.

    # --- fc0 + folded BN + ReLU (bf16 operands, f32 accumulation) ---
    h = jnp.dot(pooled.astype(jnp.bfloat16), w1_ref[...],
                preferred_element_type=jnp.float32)           # (bb, DENSE) f32
    h = jnp.maximum(h + small[_ROW_FC0_SHIFT:_ROW_FC0_SHIFT + 1, :DENSE], 0.0)
    # TODO(synk): nn.Dropout(dense_dropout) is identity in eval mode.

    # --- fc_last kept in f32 (logit precision); lane-dense 128-wide store ---
    out = jnp.dot(h, w2_ref[...], preferred_element_type=jnp.float32)
    out_ref[...] = out + small[_ROW_BLAST:_ROW_BLAST + 1, :OUT_PAD]


def _prepare_operands(params):
    """Fold eval-mode BatchNorm into weights/shifts (f32, then cast once),
    build the banded conv weight, pad fc_last to 128 lanes, pack epilogue."""
    c_scale, c_shift = params["conv_bn_scale"], params["conv_bn_shift"]
    d_scale, d_shift = params["fc0_bn_scale"], params["fc0_bn_shift"]

    # Conv weight (K, E, F) with BN scale folded, laid out as the banded
    # matrix band[l*E + e, lo*F + f] = W[l - lo, e, f] * scale[f].
    w_conv_s = params["w_conv"] * c_scale                        # (K, E, F) f32
    zero_blk = jnp.zeros((EMBED, FILTERS), jnp.float32)
    rows = []
    for l in range(SEQ):
        row = []
        for lo in range(L_PAD):
            dk = l - lo
            row.append(w_conv_s[dk] if (0 <= dk < KSIZE and lo < L_OUT)
                       else zero_blk)
        rows.append(jnp.concatenate(row, axis=1))                # (E, 256)
    w_band = jnp.concatenate(rows, axis=0).astype(jnp.bfloat16)  # (128, 256)

    # Per-column conv shift: bias*scale + BN shift on valid l_out groups,
    # exactly 0 on padded groups (keeps them 0 after ReLU).
    conv_shift_f = params["b_conv"] * c_scale + c_shift          # (F,)
    conv_shift = jnp.where(jnp.arange(L_PAD)[:, None] < L_OUT,
                           conv_shift_f[None, :], 0.0).reshape(-1)  # (256,)

    # fc0 with BN scale folded into the weight; fused bias/shift stays f32.
    w_fc0 = (params["w_fc0"] * d_scale).astype(jnp.bfloat16)     # (F, DENSE)
    fc0_shift = params["b_fc0"] * d_scale + d_shift              # (DENSE,)

    # fc_last padded to a lane-dense 128-wide output (kept f32).
    w_last = jnp.zeros((DENSE, OUT_PAD), jnp.float32)
    w_last = w_last.at[:, :NUM_CLASSES].set(params["w_fc_last"])
    b_last = jnp.zeros((OUT_PAD,), jnp.float32)
    b_last = b_last.at[:NUM_CLASSES].set(params["b_fc_last"])

    # Pack every tiny epilogue vector into one (8, 256) f32 tile.
    small = jnp.zeros((SMALL_ROWS, CONV_LANES), jnp.float32)
    small = small.at[_ROW_CONV_SHIFT, :].set(conv_shift)
    small = small.at[_ROW_FC0_SHIFT, :DENSE].set(fc0_shift)
    small = small.at[_ROW_BLAST, :OUT_PAD].set(b_last)
    return w_band, w_fc0, w_last, small


def cnn_text_classifier(x, params, *, batch_block=None):
    """x: (B, SEQ, EMBED) float32 -> logits (B, NUM_CLASSES) float32."""
    b = x.shape[0]
    if batch_block is None:
        # Large batches: multi-step grid (double-buffered x DMA; the
        # "parallel" axis lets v7x shard steps across its 2 TensorCores).
        batch_block = b if b <= 512 else 512
    bb = batch_block
    assert b % bb == 0, "batch must be divisible by the batch block"
    assert bb == b or bb % 8 == 0, "sub-batch blocks should be sublane-aligned"

    w_band, w_fc0, w_last, small = _prepare_operands(params)
    # Stream x lane-dense in bf16: one example == one full 128-lane row.
    x_flat = x.reshape(b, X_LANES).astype(jnp.bfloat16)

    def _const(shape):
        return pl.BlockSpec(shape, lambda i: (0, 0))

    out_pad = pl.pallas_call(
        cnn_text_kernel,
        out_shape=jax.ShapeDtypeStruct((b, OUT_PAD), jnp.float32),
        grid=(b // bb,),
        in_specs=[
            pl.BlockSpec((bb, X_LANES), lambda i: (i, 0)),   # x (streamed, bf16)
            _const((X_LANES, CONV_LANES)),                   # banded conv weight
            _const((FILTERS, DENSE)),                        # fc0 weight (folded)
            _const((DENSE, OUT_PAD)),                        # fc_last weight (padded)
            _const((SMALL_ROWS, CONV_LANES)),                # packed shifts/bias
        ],
        out_specs=pl.BlockSpec((bb, OUT_PAD), lambda i: (i, 0)),
        compiler_params=pltpu.CompilerParams(
            dimension_semantics=("parallel",)),   # only matters for v7x cores
        # NOTE: working set is tiny (<1 MiB even at bb=512), so the v5e
        # 16 MiB default scoped-VMEM limit is never a concern here.
    )(x_flat, w_band, w_fc0, w_last, small)
    return out_pad[:, :NUM_CLASSES]


def make_params(key):
    """Deterministic synthetic parameters (eval-mode BN as scale/shift)."""
    keys = jax.random.split(key, 16)
    eps = 1e-5

    # Conv1d(EMBED, FILTERS, KSIZE): weight arranged as (K, E, F)
    w_conv = jax.random.normal(keys[0], (KSIZE, EMBED, FILTERS), jnp.float32) * 0.1
    b_conv = jax.random.normal(keys[1], (FILTERS,), jnp.float32) * 0.1

    # BatchNorm1d(FILTERS), eval mode
    c_gamma = jax.random.uniform(keys[2], (FILTERS,), jnp.float32, 0.5, 1.5)
    c_beta = jax.random.normal(keys[3], (FILTERS,), jnp.float32) * 0.1
    c_rmean = jax.random.normal(keys[4], (FILTERS,), jnp.float32) * 0.1
    c_rvar = jax.random.uniform(keys[5], (FILTERS,), jnp.float32, 0.5, 1.5)
    c_scale = c_gamma / jnp.sqrt(c_rvar + eps)
    c_shift = c_beta - c_rmean * c_scale

    # fc0: Linear(FILTERS, DENSE), arranged as (in, out)
    w_fc0 = jax.random.normal(keys[6], (FILTERS, DENSE), jnp.float32) * 0.1
    b_fc0 = jax.random.normal(keys[7], (DENSE,), jnp.float32) * 0.1

    # BatchNorm1d(DENSE), eval mode
    d_gamma = jax.random.uniform(keys[8], (DENSE,), jnp.float32, 0.5, 1.5)
    d_beta = jax.random.normal(keys[9], (DENSE,), jnp.float32) * 0.1
    d_rmean = jax.random.normal(keys[10], (DENSE,), jnp.float32) * 0.1
    d_rvar = jax.random.uniform(keys[11], (DENSE,), jnp.float32, 0.5, 1.5)
    d_scale = d_gamma / jnp.sqrt(d_rvar + eps)
    d_shift = d_beta - d_rmean * d_scale

    # fc_last: Linear(DENSE, NUM_CLASSES)
    w_fc_last = jax.random.normal(keys[12], (DENSE, NUM_CLASSES), jnp.float32) * 0.1
    b_fc_last = jax.random.normal(keys[13], (NUM_CLASSES,), jnp.float32) * 0.1

    return dict(
        w_conv=w_conv, b_conv=b_conv,
        conv_bn_scale=c_scale, conv_bn_shift=c_shift,
        w_fc0=w_fc0, b_fc0=b_fc0,
        fc0_bn_scale=d_scale, fc0_bn_shift=d_shift,
        w_fc_last=w_fc_last, b_fc_last=b_fc_last,
    )


def reference_forward(x, p):
    """Exact f32 eval-mode semantics of the PyTorch module."""
    cols = jnp.stack([x[:, dk:dk + L_OUT, :] for dk in range(KSIZE)], axis=2)
    conv = jnp.einsum('blke,kef->blf', cols, p["w_conv"]) + p["b_conv"]
    y = jnp.maximum(conv * p["conv_bn_scale"] + p["conv_bn_shift"], 0.0)
    pooled = jnp.max(y, axis=1)
    h = jnp.dot(pooled, p["w_fc0"]) + p["b_fc0"]
    h = jnp.maximum(h * p["fc0_bn_scale"] + p["fc0_bn_shift"], 0.0)
    return jnp.dot(h, p["w_fc_last"]) + p["b_fc_last"]


def mirror_reference(x, p):
    """Pure-JAX mirror of the kernel arithmetic (folded bf16 weights, f32 acc)."""
    w_band, w_fc0, w_last, small = _prepare_operands(p)
    xb = x.reshape(x.shape[0], X_LANES).astype(jnp.bfloat16)
    conv = jnp.dot(xb, w_band, preferred_element_type=jnp.float32) + small[0]
    y = jnp.maximum(conv, 0.0).reshape(-1, L_PAD, FILTERS)
    pooled = jnp.max(y, axis=1)
    h = jnp.dot(pooled.astype(jnp.bfloat16), w_fc0,
                preferred_element_type=jnp.float32) + small[1, :DENSE]
    h = jnp.maximum(h, 0.0)
    out = jnp.dot(h, w_last, preferred_element_type=jnp.float32) + small[2, :OUT_PAD]
    return out[:, :NUM_CLASSES]


if __name__ == "__main__":
    key = jax.random.PRNGKey(0)
    kx, kp = jax.random.split(key)
    # input matches the PyTorch module's forward input: (batch, seq_len, embed_dim)
    x = jax.random.normal(kx, (BATCH, SEQ, EMBED), jnp.float32)
    params = make_params(kp)

    logits = jax.block_until_ready(cnn_text_classifier(x, params))
    assert logits.shape == (BATCH, NUM_CLASSES)

    # tight check against a reference mirroring the kernel's folded bf16 math
    ref_mirror = mirror_reference(x, params)
    assert jnp.allclose(logits, ref_mirror, atol=2e-3, rtol=2e-3)

    # looser check against the exact f32 (PyTorch eval) semantics
    ref_f32 = reference_forward(x, params)
    assert jnp.allclose(logits, ref_f32, atol=3e-2, rtol=3e-2)

    print("KERNEL_OK")
</pallas_src>

<mosaic_0001>
module attributes {stable_mosaic.version = 11 : i64} {
  func.func @cnn_text_kernel(%arg0: i32, %arg1: memref<2x128xbf16, #tpu.memory_space<vmem>>, %arg2: memref<128x256xbf16, #tpu.memory_space<vmem>>, %arg3: memref<16x32xbf16, #tpu.memory_space<vmem>>, %arg4: memref<32x128xf32, #tpu.memory_space<vmem>>, %arg5: memref<8x256xf32, #tpu.memory_space<vmem>>, %arg6: memref<2x128xf32, #tpu.memory_space<vmem>>) attributes {dimension_semantics = [#tpu.dimension_semantics<parallel>], iteration_bounds = array<i64: 1>, scalar_prefetch = 0 : i64, scratch_operands = 0 : i64, tpu.core_type = #tpu.core_type<tc>, window_params = [{transform_indices = @transform_0, window_bounds = array<i64: 2, 128>}, {pipeline_mode = #tpu.pipeline_mode<synchronous>, transform_indices = @transform_1, window_bounds = array<i64: 128, 256>}, {pipeline_mode = #tpu.pipeline_mode<synchronous>, transform_indices = @transform_2, window_bounds = array<i64: 16, 32>}, {pipeline_mode = #tpu.pipeline_mode<synchronous>, transform_indices = @transform_3, window_bounds = array<i64: 32, 128>}, {pipeline_mode = #tpu.pipeline_mode<synchronous>, transform_indices = @transform_4, window_bounds = array<i64: 8, 256>}, {transform_indices = @transform_5, window_bounds = array<i64: 2, 128>}]} {
    %c0 = arith.constant 0 : index
    %c0_0 = arith.constant 0 : index
    %0 = vector.load %arg5[%c0, %c0_0] : memref<8x256xf32, #tpu.memory_space<vmem>>, vector<8x256xf32>
    %c0_1 = arith.constant 0 : index
    %c0_2 = arith.constant 0 : index
    %1 = vector.load %arg1[%c0_1, %c0_2] : memref<2x128xbf16, #tpu.memory_space<vmem>>, vector<2x128xbf16>
    %c0_3 = arith.constant 0 : index
    %c0_4 = arith.constant 0 : index
    %2 = vector.load %arg2[%c0_3, %c0_4] : memref<128x256xbf16, #tpu.memory_space<vmem>>, vector<128x256xbf16>
    %cst = arith.constant dense<0.000000e+00> : vector<2x256xf32>
    %3 = tpu.matmul %1, %2, %cst {dimension_numbers = #tpu.dot_dimension_numbers<[1], [0], [0], [1], [0, 0, 1, 1], [], []>} : vector<2x128xbf16>, vector<128x256xbf16>, vector<2x256xf32> -> vector<2x256xf32>
    %4 = vector.extract_strided_slice %0 {offsets = [0, 0], sizes = [1, 256], strides = [1, 1]} : vector<8x256xf32> to vector<1x256xf32>
    %5 = vector.broadcast %4 : vector<1x256xf32> to vector<2x256xf32>
    %6 = arith.addf %3, %5 : vector<2x256xf32>
    %cst_5 = arith.constant 0.000000e+00 : f32
    %7 = vector.broadcast %cst_5 : f32 to vector<2x256xf32>
    %8 = arith.maximumf %6, %7 : vector<2x256xf32>
    %c128_i32 = arith.constant 128 : i32
    %9 = tpu.dynamic_rotate %8 by %c128_i32 dim 1 : vector<2x256xf32>, i32 -> vector<2x256xf32>
    %10 = arith.maximumf %8, %9 : vector<2x256xf32>
    %c192_i32 = arith.constant 192 : i32
    %11 = tpu.dynamic_rotate %10 by %c192_i32 dim 1 : vector<2x256xf32>, i32 -> vector<2x256xf32>
    %12 = arith.maximumf %10, %11 : vector<2x256xf32>
    %c224_i32 = arith.constant 224 : i32
    %13 = tpu.dynamic_rotate %12 by %c224_i32 dim 1 : vector<2x256xf32>, i32 -> vector<2x256xf32>
    %14 = arith.maximumf %12, %13 : vector<2x256xf32>
    %c240_i32 = arith.constant 240 : i32
    %15 = tpu.dynamic_rotate %14 by %c240_i32 dim 1 : vector<2x256xf32>, i32 -> vector<2x256xf32>
    %16 = arith.maximumf %14, %15 : vector<2x256xf32>
    %17 = vector.extract_strided_slice %16 {offsets = [0, 0], sizes = [2, 16], strides = [1, 1]} : vector<2x256xf32> to vector<2x16xf32>
    %18 = arith.truncf %17 : vector<2x16xf32> to vector<2x16xbf16>
    %c0_6 = arith.constant 0 : index
    %c0_7 = arith.constant 0 : index
    %19 = vector.load %arg3[%c0_6, %c0_7] : memref<16x32xbf16, #tpu.memory_space<vmem>>, vector<16x32xbf16>
    %cst_8 = arith.constant dense<0.000000e+00> : vector<2x32xf32>
    %20 = tpu.matmul %18, %19, %cst_8 {dimension_numbers = #tpu.dot_dimension_numbers<[1], [0], [0], [1], [0, 0, 1, 1], [], []>} : vector<2x16xbf16>, vector<16x32xbf16>, vector<2x32xf32> -> vector<2x32xf32>
    %21 = vector.extract_strided_slice %0 {offsets = [1, 0], sizes = [1, 32], strides = [1, 1]} : vector<8x256xf32> to vector<1x32xf32>
    %22 = vector.broadcast %21 : vector<1x32xf32> to vector<2x32xf32>
    %23 = arith.addf %20, %22 : vector<2x32xf32>
    %cst_9 = arith.constant 0.000000e+00 : f32
    %24 = vector.broadcast %cst_9 : f32 to vector<2x32xf32>
    %25 = arith.maximumf %23, %24 : vector<2x32xf32>
    %c0_10 = arith.constant 0 : index
    %c0_11 = arith.constant 0 : index
    %26 = vector.load %arg4[%c0_10, %c0_11] : memref<32x128xf32, #tpu.memory_space<vmem>>, vector<32x128xf32>
    %cst_12 = arith.constant dense<0.000000e+00> : vector<2x128xf32>
    %27 = tpu.matmul %25, %26, %cst_12 {dimension_numbers = #tpu.dot_dimension_numbers<[1], [0], [0], [1], [0, 0, 1, 1], [], []>} : vector<2x32xf32>, vector<32x128xf32>, vector<2x128xf32> -> vector<2x128xf32>
    %28 = vector.extract_strided_slice %0 {offsets = [2, 0], sizes = [1, 128], strides = [1, 1]} : vector<8x256xf32> to vector<1x128xf32>
    %29 = vector.broadcast %28 : vector<1x128xf32> to vector<2x128xf32>
    %30 = arith.addf %27, %29 : vector<2x128xf32>
    %c0_13 = arith.constant 0 : index
    %c0_14 = arith.constant 0 : index
    %31 = vector.load %arg6[%c0_13, %c0_14] : memref<2x128xf32, #tpu.memory_space<vmem>>, vector<2x128xf32>
    tpu.vector_store %arg6[%c0_13, %c0_14], %30 {strides = array<i32>} : memref<2x128xf32, #tpu.memory_space<vmem>>, vector<2x128xf32>,
    return
  }
  func.func @transform_0(%arg0: i32) -> (i32, i32) {
    %c0_i32 = arith.constant 0 : i32
    %c0_i32_0 = arith.constant 0 : i32
    return %arg0, %c0_i32 : i32, i32
  }
  func.func @transform_1(%arg0: i32) -> (i32, i32) {
    %c0_i32 = arith.constant 0 : i32
    %c0_i32_0 = arith.constant 0 : i32
    %c0_i32_1 = arith.constant 0 : i32
    return %c0_i32, %c0_i32_0 : i32, i32
  }
  func.func @transform_2(%arg0: i32) -> (i32, i32) {
    %c0_i32 = arith.constant 0 : i32
    %c0_i32_0 = arith.constant 0 : i32
    %c0_i32_1 = arith.constant 0 : i32
    return %c0_i32, %c0_i32_0 : i32, i32
  }
  func.func @transform_3(%arg0: i32) -> (i32, i32) {
    %c0_i32 = arith.constant 0 : i32
    %c0_i32_0 = arith.constant 0 : i32
    %c0_i32_1 = arith.constant 0 : i32
    return %c0_i32, %c0_i32_0 : i32, i32
  }
  func.func @transform_4(%arg0: i32) -> (i32, i32) {
    %c0_i32 = arith.constant 0 : i32
    %c0_i32_0 = arith.constant 0 : i32
    %c0_i32_1 = arith.constant 0 : i32
    return %c0_i32, %c0_i32_0 : i32, i32
  }
  func.func @transform_5(%arg0: i32) -> (i32, i32) {
    %c0_i32 = arith.constant 0 : i32
    %c0_i32_0 = arith.constant 0 : i32
    return %arg0, %c0_i32 : i32, i32
  }
}

</mosaic_0001>

<llo_original>
// kernel: tpu_custom_call.1
$region0: #{tpu_custom_call.1}
  #allocation0 [shape = 'u32[]', space=smem, size = 0x4, offset = 0x4, fixed_abs, tag = 'smem constant byte address 0x4 - core index']
  #allocation1 [shape = 'u32[144,128]{1,0:T(1,128)}', space=vmem, size = 0x12000, scoped, tag = 'internal scratch']
  %s0 = inlined_call_operand.hbm [shape: bf16[2,128], index: 0, kind: input, shape index: {}]
  %s1 = inlined_call_operand.hbm [shape: bf16[128,256], index: 1, kind: input, shape index: {}]
  %s2 = inlined_call_operand.hbm [shape: bf16[16,32], index: 2, kind: input, shape index: {}]
  %s3 = inlined_call_operand.hbm [shape: f32[32,128], index: 3, kind: input, shape index: {}]
  %s4 = inlined_call_operand.hbm [shape: f32[8,256], index: 4, kind: input, shape index: {}]
  %s5 = inlined_call_operand.hbm [shape: f32[2,128], index: 5, kind: output, shape index: {}]
  %s6 = sld [smem:[#allocation0]]
  $region50: #{tpu_custom_call.1} parent=0
    _
  %s8 = ssub.s32 1, %s6
  %s9 = scalar_select 0, %s8, %s6
  $region1: #{tpu_custom_call.1} parent=0
    #allocation2 [shape = 'u8[512]{0}', space=vmem, size = 0x400, scoped, tag = 'input window, operand 0, single buffered']
    #allocation3 [shape = 's32[1]{0}', space=sflag, size = 0x4, scoped, tag = 'scoped memory for tpu_custom_call.1']
    #allocation4 [shape = 's32[1]{0}', space=sflag, size = 0x4, scoped, tag = 'scoped memory for tpu_custom_call.1']
    #allocation5 [shape = 'u8[65536]{0}', space=vmem, size = 0x10000, scoped, tag = 'input window, operand 1, single buffered']
    #allocation6 [shape = 's32[1]{0}', space=sflag, size = 0x4, scoped, tag = 'scoped memory for tpu_custom_call.1']
    #allocation7 [shape = 'u8[4096]{0}', space=vmem, size = 0x1000, scoped, tag = 'input window, operand 2, single buffered']
    #allocation8 [shape = 'u8[16384]{0}', space=vmem, size = 0x4000, scoped, tag = 'input window, operand 3, single buffered']
    #allocation9 [shape = 's32[1]{0}', space=sflag, size = 0x4, scoped, tag = 'scoped memory for tpu_custom_call.1']
    #allocation10 [shape = 'u8[8192]{0}', space=vmem, size = 0x2000, scoped, tag = 'input window, operand 4, single buffered']
    #allocation11 [shape = 'u8[1024]{0}', space=vmem, size = 0x400, scoped, tag = 'output window, operand 0, single buffered']
    %10 = vsyncpa [#allocation3], 0
    %11 = vsyncpa [#allocation6], 0
    %12 = vsyncpa [#allocation9], 0
    %13 = vsyncpa [#allocation4], 0
    // Predicated region
    $region2: #{tpu_custom_call.1} parent=1 // pred_check
      _
    $region3: #{tpu_custom_call.1} parent=1 // pred_check_branch
      %15 = sbr.rel (0) target = $region5
    $region4: #{tpu_custom_call.1} parent=1 // pred_region
      %s17 = ssub.s32 16, 16
      %18 = vsyncadd [#allocation3], %s17
      %s20 = sshll.u32 [#allocation2], 4
      %s21 = int_to_ptr.vmem [resolvable:$true] %s20
      %23 = dma.hbm_to_vmem [thread:$0]  %s0, 16, %s21, [#allocation3]
    $region5: #{tpu_custom_call.1} parent=1 // pred_fallthru
      _
    // Predicated region
    $region6: #{tpu_custom_call.1} parent=1 // pred_check
      _
    $region7: #{tpu_custom_call.1} parent=1 // pred_check_branch
      %25 = sbr.rel (0) target = $region9
    $region8: #{tpu_custom_call.1} parent=1 // pred_region
      %s27 = ssub.s32 2048, 2048
      %28 = vsyncadd [#allocation6], %s27
      %s29 = sshll.u32 [#allocation5], 4
      %s30 = int_to_ptr.vmem [resolvable:$true] %s29
      %35 = dma.hbm_to_vmem [thread:$0]  %s1, 2048, %s30, [#allocation6], 128, 128, 8
    $region9: #{tpu_custom_call.1} parent=1 // pred_fallthru
      _
    // Predicated region
    $region10: #{tpu_custom_call.1} parent=1 // pred_check
      _
    $region11: #{tpu_custom_call.1} parent=1 // pred_check_branch
      %37 = sbr.rel (0) target = $region13
    $region12: #{tpu_custom_call.1} parent=1 // pred_region
      %s39 = ssub.s32 128, 128
      %40 = vsyncadd [#allocation6], %s39
      %s41 = sshll.u32 [#allocation7], 4
      %s42 = int_to_ptr.vmem [resolvable:$true] %s41
      %47 = dma.hbm_to_vmem [thread:$0]  %s2, 128, %s42, [#allocation6], 64, 64, 4
    $region13: #{tpu_custom_call.1} parent=1 // pred_fallthru
      _
    // Predicated region
    $region14: #{tpu_custom_call.1} parent=1 // pred_check
      _
    $region15: #{tpu_custom_call.1} parent=1 // pred_check_branch
      %49 = sbr.rel (0) target = $region17
    $region16: #{tpu_custom_call.1} parent=1 // pred_region
      %s51 = ssub.s32 512, 512
      %52 = vsyncadd [#allocation9], %s51
      %s53 = sshll.u32 [#allocation8], 4
      %s54 = int_to_ptr.vmem [resolvable:$true] %s53
      %59 = dma.hbm_to_vmem [thread:$0]  %s3, 512, %s54, [#allocation9], 128, 128, 8
    $region17: #{tpu_custom_call.1} parent=1 // pred_fallthru
      _
    // Predicated region
    $region18: #{tpu_custom_call.1} parent=1 // pred_check
      _
    $region19: #{tpu_custom_call.1} parent=1 // pred_check_branch
      %61 = sbr.rel (0) target = $region21
    $region20: #{tpu_custom_call.1} parent=1 // pred_region
      %s63 = ssub.s32 256, 256
      %64 = vsyncadd [#allocation9], %s63
      %s66 = sshll.u32 [#allocation10], 4
      %s67 = int_to_ptr.vmem [resolvable:$true] %s66
      %69 = dma.hbm_to_vmem [thread:$0]  %s4, 256, %s67, [#allocation9]
    $region21: #{tpu_custom_call.1} parent=1 // pred_fallthru
      _
    // Predicated region
    $region22: #{tpu_custom_call.1} parent=1 // pred_check
      _
    $region23: #{tpu_custom_call.1} parent=1 // pred_check_branch
      %71 = sbr.rel (0) target = $region25
    $region24: #{tpu_custom_call.1} parent=1 // pred_region
      %72 = dma.done [#allocation3], 16
    $region25: #{tpu_custom_call.1} parent=1 // pred_fallthru
      _
    // Predicated region
    $region26: #{tpu_custom_call.1} parent=1 // pred_check
      _
    $region27: #{tpu_custom_call.1} parent=1 // pred_check_branch
      %74 = sbr.rel (0) target = $region29
    $region28: #{tpu_custom_call.1} parent=1 // pred_region
      %75 = dma.done [#allocation6], 2048
    $region29: #{tpu_custom_call.1} parent=1 // pred_fallthru
      _
    // Predicated region
    $region30: #{tpu_custom_call.1} parent=1 // pred_check
      _
    $region31: #{tpu_custom_call.1} parent=1 // pred_check_branch
      %77 = sbr.rel (0) target = $region33
    $region32: #{tpu_custom_call.1} parent=1 // pred_region
      %78 = dma.done [#allocation6], 128
    $region33: #{tpu_custom_call.1} parent=1 // pred_fallthru
      _
    // Predicated region
    $region34: #{tpu_custom_call.1} parent=1 // pred_check
      _
    $region35: #{tpu_custom_call.1} parent=1 // pred_check_branch
      %80 = sbr.rel (0) target = $region37
    $region36: #{tpu_custom_call.1} parent=1 // pred_region
      %81 = dma.done [#allocation9], 512
    $region37: #{tpu_custom_call.1} parent=1 // pred_fallthru
      _
    // Predicated region
    $region38: #{tpu_custom_call.1} parent=1 // pred_check
      _
    $region39: #{tpu_custom_call.1} parent=1 // pred_check_branch
      %83 = sbr.rel (0) target = $region41
    $region40: #{tpu_custom_call.1} parent=1 // pred_region
      %84 = dma.done [#allocation9], 256
    $region41: #{tpu_custom_call.1} parent=1 // pred_fallthru
      _
    %v86 = vld [vmem:[#allocation10] sm:$0xff]
    %v87 = vld [vmem:[#allocation10 + $0x8] sm:$0xff]
    %v88 = vld [vmem:[#allocation2] sm:$0x1]
    %v89 = vld [vmem:[#allocation5] sm:$0xff]
    %v90 = vld [vmem:[#allocation5 + $0x8] sm:$0xff]
    %v91 = vld [vmem:[#allocation5 + $0x10] sm:$0xff]
    %v92 = vld [vmem:[#allocation5 + $0x18] sm:$0xff]
    %v93 = vld [vmem:[#allocation5 + $0x20] sm:$0xff]
    %v94 = vld [vmem:[#allocation5 + $0x28] sm:$0xff]
    %v95 = vld [vmem:[#allocation5 + $0x30] sm:$0xff]
    %v96 = vld [vmem:[#allocation5 + $0x38] sm:$0xff]
    %v97 = vld [vmem:[#allocation5 + $0x40] sm:$0xff]
    %v98 = vld [vmem:[#allocation5 + $0x48] sm:$0xff]
    %v99 = vld [vmem:[#allocation5 + $0x50] sm:$0xff]
    %v100 = vld [vmem:[#allocation5 + $0x58] sm:$0xff]
    %v101 = vld [vmem:[#allocation5 + $0x60] sm:$0xff]
    %v102 = vld [vmem:[#allocation5 + $0x68] sm:$0xff]
    %v103 = vld [vmem:[#allocation5 + $0x70] sm:$0xff]
    %v104 = vld [vmem:[#allocation5 + $0x78] sm:$0xff]
    %v105 = vlaneseq
    %v106 = vshrl.u32 %v105, 7
    %v107 = vsub.s32 0, %v106
    %v108 = vrot.slane %v86, %v107
    %v109 = vlaneseq
    %v110 = vshrl.u32 %v109, 7
    %v111 = vsub.s32 0, %v110
    %v112 = vrot.slane %v87, %v111
    %v129 = vunpack.c.l.b16 %v89
    %v130 = vunpack.c.h.b16 %v89
    %v131 = vunpack.c.l.b16 %v90
    %v132 = vunpack.c.h.b16 %v90
    %v133 = vunpack.c.l.b16 %v91
    %v134 = vunpack.c.h.b16 %v91
    %v135 = vunpack.c.l.b16 %v92
    %v136 = vunpack.c.h.b16 %v92
    %v137 = vunpack.c.l.b16 %v93
    %v138 = vunpack.c.h.b16 %v93
    %v139 = vunpack.c.l.b16 %v94
    %v140 = vunpack.c.h.b16 %v94
    %v141 = vunpack.c.l.b16 %v95
    %v142 = vunpack.c.h.b16 %v95
    %v143 = vunpack.c.l.b16 %v96
    %v144 = vunpack.c.h.b16 %v96
    %v145 = vunpack.c.l.b16 %v97
    %v146 = vunpack.c.h.b16 %v97
    %v147 = vunpack.c.l.b16 %v98
    %v148 = vunpack.c.h.b16 %v98
    %v149 = vunpack.c.l.b16 %v99
    %v150 = vunpack.c.h.b16 %v99
    %v151 = vunpack.c.l.b16 %v100
    %v152 = vunpack.c.h.b16 %v100
    %v153 = vunpack.c.l.b16 %v101
    %v154 = vunpack.c.h.b16 %v101
    %v155 = vunpack.c.l.b16 %v102
    %v156 = vunpack.c.h.b16 %v102
    %v157 = vunpack.c.l.b16 %v103
    %v158 = vunpack.c.h.b16 %v103
    %v159 = vunpack.c.l.b16 %v104
    %v160 = vunpack.c.h.b16 %v104
    %v161 = vpack.c.b16 %v131, %v129
    %v162 = vpack.c.b16 %v132, %v130
    %v163 = vpack.c.b16 %v135, %v133
    %v164 = vpack.c.b16 %v136, %v134
    %v165 = vpack.c.b16 %v139, %v137
    %v166 = vpack.c.b16 %v140, %v138
    %v167 = vpack.c.b16 %v143, %v141
    %v168 = vpack.c.b16 %v144, %v142
    %v169 = vpack.c.b16 %v147, %v145
    %v170 = vpack.c.b16 %v148, %v146
    %v171 = vpack.c.b16 %v151, %v149
    %v172 = vpack.c.b16 %v152, %v150
    %v173 = vpack.c.b16 %v155, %v153
    %v174 = vpack.c.b16 %v156, %v154
    %v175 = vpack.c.b16 %v159, %v157
    %v176 = vpack.c.b16 %v160, %v158
    %193 = vmatprep.subr.bf16.mxu0 %v176
    %194 = vmatpush1.bf16.msra.mxu0 %v175
    %195 = vmatprep.subr.bf16.mxu0 %v174
    %196 = vmatpush1.bf16.msra.mxu0 %v173
    %197 = vmatprep.subr.bf16.mxu0 %v172
    %198 = vmatpush1.bf16.msra.mxu0 %v171
    %199 = vmatprep.subr.bf16.mxu0 %v170
    %200 = vmatpush1.bf16.msra.mxu0 %v169
    %201 = vmatprep.subr.bf16.mxu0 %v168
    %202 = vmatpush1.bf16.msra.mxu0 %v167
    %203 = vmatprep.subr.bf16.mxu0 %v166
    %204 = vmatpush1.bf16.msra.mxu0 %v165
    %205 = vmatprep.subr.bf16.mxu0 %v164
    %206 = vmatpush1.bf16.msra.mxu0 %v163
    %207 = vmatprep.subr.bf16.mxu0 %v162
    %208 = vmatpush1.bf16.msra.mxu0 %v161
    %209 = vmatprep.subr.bf16.mxu0 0
    %210 = vmatpush2.bf16.msra.mxu0 0
    %211 = vmatprep.subr.bf16.mxu0 0
    %212 = vmatpush2.bf16.msra.mxu0 0
    %213 = vmatprep.subr.bf16.mxu0 0
    %214 = vmatpush2.bf16.msra.mxu0 0
    %215 = vmatprep.subr.bf16.mxu0 0
    %216 = vmatpush2.bf16.msra.mxu0 0
    %217 = vmatprep.subr.bf16.mxu0 0
    %218 = vmatpush2.bf16.msra.mxu0 0
    %219 = vmatprep.subr.bf16.mxu0 0
    %220 = vmatpush2.bf16.msra.mxu0 0
    %221 = vmatprep.subr.bf16.mxu0 0
    %222 = vmatpush2.bf16.msra.mxu0 0
    %223 = vmatprep.subr.bf16.mxu0 0
    %224 = vmatpush2.bf16.msra.mxu0 0
    %225 = vmatprep.mubr.bf16.mxu0 0
    %226 = vmatmul.mubr.bf16.gmra.mxu0 %v88
    %v227 = vpop.f32.mrf.mxu0
    %v228 = vadd.f32 %v108, %v227
    %v229 = vpop.f32.mrf.mxu0
    %v230 = vadd.f32 %v112, %v229
    %v231 = vpop.f32.mrf.mxu0
    %v232 = vpop.f32.mrf.mxu0
    %233 = vdwg.mxu0
    %v234 = vmax.f32 %v228, 0.0
    %v235 = vmax.f32 %v230, 0.0
    %v236 = vmax.f32 %v234, %v235
    %237 = vrot.lane.b32.xlu0 %v236, 64
    %v238 = vpop.permute.xlu0 %237
    %v239 = vlaneseq
    %v240 = vand.u32 %v239, 127
    %v241 = vmax.f32 %v236, %v238
    %242 = vrot.lane.b32.xlu0 %v241, 96
    %v243 = vpop.permute.xlu0 %242
    %v244 = vmax.f32 %v241, %v243
    %245 = vrot.lane.b32.xlu0 %v244, 112
    %v246 = vpop.permute.xlu0 %245
    %v247 = vmax.f32 %v244, %v246
    %v248 = vpack.c.bf16 %v247, %v247
    %v249 = vld [vmem:[#allocation7] sm:$0xf]
    %v250 = vld [vmem:[#allocation7 + $0x4] sm:$0xf]
    %v251 = vlaneseq
    %v252 = vshrl.u32 %v251, 7
    %v253 = vsub.s32 1, %v252
    %v254 = vrot.slane %v86, %v253
    %v257 = vunpack.c.l.b16 %v249
    %v258 = vunpack.c.l.b16 %v250
    %v259 = vpack.c.b16 %v258, %v257
    %vm261 = vcmask 130048
    %v263 = vsel %vm261, %v248, 0
    %265 = vmatprep.subr.bf16.mxu0 0
    %266 = vmatpush1.bf16.msra.mxu0 0
    %267 = vmatprep.subr.bf16.mxu0 0
    %268 = vmatpush1.bf16.msra.mxu0 0
    %269 = vmatprep.subr.bf16.mxu0 0
    %270 = vmatpush1.bf16.msra.mxu0 0
    %271 = vmatprep.subr.bf16.mxu0 0
    %272 = vmatpush1.bf16.msra.mxu0 0
    %273 = vmatprep.subr.bf16.mxu0 0
    %274 = vmatpush1.bf16.msra.mxu0 0
    %275 = vmatprep.subr.bf16.mxu0 0
    %276 = vmatpush1.bf16.msra.mxu0 0
    %277 = vmatprep.subr.bf16.mxu0 0
    %278 = vmatpush1.bf16.msra.mxu0 0
    %279 = vmatprep.subr.bf16.mxu0 0
    %280 = vmatpush1.bf16.msra.mxu0 %v259
    %281 = vmatprep.subr.bf16.mxu0 0
    %282 = vmatpush2.bf16.msra.mxu0 0
    %283 = vmatprep.subr.bf16.mxu0 0
    %284 = vmatpush2.bf16.msra.mxu0 0
    %285 = vmatprep.subr.bf16.mxu0 0
    %286 = vmatpush2.bf16.msra.mxu0 0
    %287 = vmatprep.subr.bf16.mxu0 0
    %288 = vmatpush2.bf16.msra.mxu0 0
    %289 = vmatprep.subr.bf16.mxu0 0
    %290 = vmatpush2.bf16.msra.mxu0 0
    %291 = vmatprep.subr.bf16.mxu0 0
    %292 = vmatpush2.bf16.msra.mxu0 0
    %293 = vmatprep.subr.bf16.mxu0 0
    %294 = vmatpush2.bf16.msra.mxu0 0
    %295 = vmatprep.subr.bf16.mxu0 0
    %296 = vmatpush2.bf16.msra.mxu0 0
    %297 = vmatprep.mubr.bf16.mxu0 0
    %298 = vmatmul.mubr.bf16.gmra.mxu0 %v263
    %v299 = vpop.f32.mrf.mxu0
    %v300 = vadd.f32 %v254, %v299
    %v301 = vpop.f32.mrf.mxu0
    %v302 = vpop.f32.mrf.mxu0
    %v303 = vpop.f32.mrf.mxu0
    %304 = vdwg.mxu0
    %v305 = vmax.f32 %v300, 0.0
    %v306 = vld [vmem:[#allocation8] sm:$0xff]
    %v307 = vld [vmem:[#allocation8 + $0x8] sm:$0xff]
    %v308 = vld [vmem:[#allocation8 + $0x10] sm:$0xff]
    %v309 = vld [vmem:[#allocation8 + $0x18] sm:$0xff]
    %v310 = vlaneseq
    %v311 = vshrl.u32 %v310, 7
    %v312 = vsub.s32 2, %v311
    %v313 = vrot.slane %v86, %v312
    %vm314 = vcmask 261120
    %v316 = vsel %vm314, %v305, 0
    %318 = vmatprep.subr.mxu0 0.0
    %319 = vmatpush1.msra.mxu0 0.0
    %320 = vmatprep.subr.mxu0 0.0
    %321 = vmatpush1.msra.mxu0 0.0
    %322 = vmatprep.subr.mxu0 0.0
    %323 = vmatpush1.msra.mxu0 0.0
    %324 = vmatprep.subr.mxu0 0.0
    %325 = vmatpush1.msra.mxu0 0.0
    %326 = vmatprep.subr.mxu0 0.0
    %327 = vmatpush1.msra.mxu0 0.0
    %328 = vmatprep.subr.mxu0 0.0
    %329 = vmatpush1.msra.mxu0 0.0
    %330 = vmatprep.subr.mxu0 0.0
    %331 = vmatpush1.msra.mxu0 0.0
    %332 = vmatprep.subr.mxu0 0.0
    %333 = vmatpush1.msra.mxu0 0.0
    %334 = vmatprep.subr.mxu0 0.0
    %335 = vmatpush1.msra.mxu0 0.0
    %336 = vmatprep.subr.mxu0 0.0
    %337 = vmatpush1.msra.mxu0 0.0
    %338 = vmatprep.subr.mxu0 0.0
    %339 = vmatpush1.msra.mxu0 0.0
    %340 = vmatprep.subr.mxu0 0.0
    %341 = vmatpush1.msra.mxu0 0.0
    %342 = vmatprep.subr.mxu0 0.0
    %343 = vmatpush1.msra.mxu0 %v309
    %344 = vmatprep.subr.mxu0 0.0
    %345 = vmatpush1.msra.mxu0 %v308
    %346 = vmatprep.subr.mxu0 0.0
    %347 = vmatpush1.msra.mxu0 %v307
    %348 = vmatprep.subr.mxu0 0.0
    %349 = vmatpush1.msra.mxu0 %v306
    %350 = vmatprep.subr.mxu0 0.0
    %351 = vmatpush2.msra.mxu0 0.0
    %352 = vmatprep.subr.mxu0 0.0
    %353 = vmatpush2.msra.mxu0 0.0
    %354 = vmatprep.subr.mxu0 0.0
    %355 = vmatpush2.msra.mxu0 0.0
    %356 = vmatprep.subr.mxu0 0.0
    %357 = vmatpush2.msra.mxu0 0.0
    %358 = vmatprep.subr.mxu0 0.0
    %359 = vmatpush2.msra.mxu0 0.0
    %360 = vmatprep.subr.mxu0 0.0
    %361 = vmatpush2.msra.mxu0 0.0
    %362 = vmatprep.subr.mxu0 0.0
    %363 = vmatpush2.msra.mxu0 0.0
    %364 = vmatprep.subr.mxu0 0.0
    %365 = vmatpush2.msra.mxu0 0.0
    %366 = vmatprep.subr.mxu0 0.0
    %367 = vmatpush2.msra.mxu0 0.0
    %368 = vmatprep.subr.mxu0 0.0
    %369 = vmatpush2.msra.mxu0 0.0
    %370 = vmatprep.subr.mxu0 0.0
    %371 = vmatpush2.msra.mxu0 0.0
    %372 = vmatprep.subr.mxu0 0.0
    %373 = vmatpush2.msra.mxu0 0.0
    %374 = vmatprep.subr.mxu0 0.0
    %375 = vmatpush2.msra.mxu0 0.0
    %376 = vmatprep.subr.mxu0 0.0
    %377 = vmatpush2.msra.mxu0 0.0
    %378 = vmatprep.subr.mxu0 0.0
    %379 = vmatpush2.msra.mxu0 0.0
    %380 = vmatprep.subr.mxu0 0.0
    %381 = vmatpush2.msra.mxu0 0.0
    %382 = vmatprep.mubr.f32.mxu0 0.0
    %383 = vmatmul.mubr.f32.gmra.mxu0 %v316
    %v384 = vpop.f32.mrf.mxu0
    %v385 = vadd.f32 %v313, %v384
    %v386 = vpop.f32.mrf.mxu0
    %387 = vdwg.mxu0
    %388 = vst [vmem:[#allocation11] sm:$0x3] %v385
    // Predicated region
    $region42: #{tpu_custom_call.1} parent=1 // pred_check
      _
    $region43: #{tpu_custom_call.1} parent=1 // pred_check_branch
      %390 = sbr.rel (0) target = $region45
    $region44: #{tpu_custom_call.1} parent=1 // pred_region
      %s392 = ssub.s32 32, 32
      %393 = vsyncadd [#allocation4], %s392
      %s395 = sshll.u32 [#allocation11], 4
      %s396 = int_to_ptr.vmem [resolvable:$true] %s395
      %398 = dma.vmem_to_hbm [thread:$0]  %s396, 32, %s5, [#allocation4]
    $region45: #{tpu_custom_call.1} parent=1 // pred_fallthru
      _
    // Predicated region
    $region46: #{tpu_custom_call.1} parent=1 // pred_check
      _
    $region47: #{tpu_custom_call.1} parent=1 // pred_check_branch
      %400 = sbr.rel (0) target = $region49
    $region48: #{tpu_custom_call.1} parent=1 // pred_region
      %401 = dma.done [#allocation4], 32
    $region49: #{tpu_custom_call.1} parent=1 // pred_fallthru
      _
    %402 = vsyncpa [#allocation3], 1
    %403 = vsyncpa [#allocation6], 1
    %404 = vsyncpa [#allocation9], 1
    %405 = vsyncpa [#allocation4], 1

</llo_original>
